<compile_context>
chip_gen: v5e
topology: v5e:2x2
jax: 0.10.0
libtpu: 0.0.40
codegen_flags: <defaults>
</compile_context>

<pallas_src>
import functools

import jax
import jax.numpy as jnp
from jax.experimental import pallas as pl
from jax.experimental.pallas import tpu as pltpu


def _pick_rows_per_step(Hp: int, B: int, bytes_per_patch_row: int,
                        budget: int = 2 << 20) -> int:
    """Largest divisor TH of Hp whose input slab fits `budget`; when B == 1, cap TH so
    the grid still has >= 2 blocks for the second TensorCore (v7x megacore)."""
    max_th = Hp if B >= 2 else max(1, Hp // 2)
    best = 1
    for cand in range(1, Hp + 1):
        if Hp % cand == 0 and cand <= max_th and cand * bytes_per_patch_row <= budget:
            best = cand
    return best


def _make_kernel(C: int, p: int, W: int, Wp: int, TH: int, d_model: int):
    CK = C * p  # contraction width of each per-kw matmul: (c, kh)

    def kernel(x_ref, w_ref, b_ref, o_ref, xt_ref):
        # x_ref : (1, C, TH*p, W)      input slab: TH rows of patches of one image
        # w_ref : (p, C*p, d_model)    conv weight, index [kw, c*p + kh, d]
        # b_ref : (1, d_model)         bias (f32)
        # o_ref : (1, TH, Wp, d_model) output tile (final dtype)
        # xt_ref: (W, C*p)             VMEM scratch: transposed slab of one patch-row
        bias = b_ref[...]
        for th in range(TH):                                 # static unroll
            xs = x_ref[0, :, pl.ds(th * p, p), :]            # (C, p, W)
            # (c, kh) -> rows, then a single 2-D transpose puts the image W axis on
            # sublanes, where strided slicing (one slice per kw) is cheap.
            xt_ref[...] = xs.reshape(CK, W).T                # (W, C*p)
            acc = jnp.zeros((Wp, d_model), jnp.float32)
            for kw in range(p):                              # static unroll
                a = xt_ref[pl.ds(kw, Wp, stride=p), :]       # (Wp, C*p) rows = wp
                acc = acc + jnp.dot(a, w_ref[kw],
                                    preferred_element_type=jnp.float32)
            o_ref[0, th, :, :] = (acc + bias).astype(o_ref.dtype)

    return kernel


@functools.partial(jax.jit, static_argnames=("patch_size",))
def img_linear_backbone(x, weight, bias, *, patch_size):
    """
    x      : (B, C, H, W)        NCHW image batch (PyTorch convention)
    weight : (d_model, C, p, p)  conv weight (PyTorch OIHW)
    bias   : (d_model,)
    returns: (B, N, d_model), N = (H // p) * (W // p)
    """
    B, C, H, W = x.shape
    d_model = weight.shape[0]
    p = patch_size
    # TODO(synk): support patch_size % 8 != 0 (e.g. ViT-H/14) via an XLA-side
    # patch-matrix fallback; 8/16/32 covers the common configurations.
    assert p % 8 == 0, "this kernel assumes patch_size % 8 == 0"
    Hp, Wp = H // p, W // p
    N = Hp * Wp
    K = C * p * p
    itemsize = jnp.dtype(x.dtype).itemsize

    # Conv weight (d_model, C, p, p) -> (p_kw, C*p_kh, d_model): for each kw slice the
    # rows match the (c, kh) contraction the kernel builds from the input slab.
    # (Tiny array; this wrapper-side reorder is negligible HBM traffic.)
    w_k = jnp.transpose(weight, (3, 1, 2, 0)).reshape(p, C * p, d_model).astype(x.dtype)
    b_row = bias.astype(jnp.float32).reshape(1, d_model)

    # Rows-of-patches per grid step.
    slab_row_bytes = C * p * W * itemsize
    TH = _pick_rows_per_step(Hp, B, slab_row_bytes)
    grid = (B, Hp // TH)

    # Explicit VMEM budget (v5e default scoped limit is 16 MiB, v7x physical is 64 MiB).
    footprint = (2 * TH * slab_row_bytes                 # input slab (double buffered)
                 + 2 * w_k.size * itemsize               # weight (resident)
                 + 2 * b_row.size * 4                    # bias
                 + 2 * TH * Wp * d_model * itemsize      # output tile
                 + W * C * p * itemsize                  # transpose scratch
                 + Wp * d_model * 4)                     # f32 accumulator
    vmem_limit = int(min(max(2 * footprint, 16 << 20), 64 << 20))

    kernel = _make_kernel(C, p, W, Wp, TH, d_model)

    out = pl.pallas_call(
        kernel,
        out_shape=jax.ShapeDtypeStruct((B, Hp, Wp, d_model), x.dtype),
        grid_spec=pltpu.PrefetchScalarGridSpec(
            num_scalar_prefetch=0,
            grid=grid,
            in_specs=[
                # NCHW slab: TH patch-rows of image b.  (TH*p, W) satisfies the (8,128)
                # rule: TH*p % 8 == 0 and W is the full array dim.
                pl.BlockSpec((1, C, TH * p, W), lambda b, g: (b, 0, g, 0)),
                # Weight / bias: full-extent blocks, block index never changes -> stay
                # resident in VMEM across the entire grid.
                pl.BlockSpec((p, C * p, d_model), lambda b, g: (0, 0, 0)),
                pl.BlockSpec((1, d_model), lambda b, g: (0, 0)),
            ],
            out_specs=pl.BlockSpec((1, TH, Wp, d_model), lambda b, g: (b, g, 0, 0)),
            scratch_shapes=[pltpu.VMEM((W, C * p), x.dtype)],
        ),
        compiler_params=pltpu.CompilerParams(
            dimension_semantics=("parallel", "parallel"),
            vmem_limit_bytes=vmem_limit,
        ),
        cost_estimate=pl.CostEstimate(
            flops=2 * B * N * K * d_model,
            transcendentals=0,
            bytes_accessed=(B * C * Hp * p * W * itemsize
                            + w_k.size * itemsize
                            + B * N * d_model * itemsize),
        ),
    )(x, w_k, b_row)

    # (B, Hp, Wp, d_model) -> (B, N, d_model): row-major compatible, metadata-only.
    return out.reshape(B, N, d_model)


def _reference(x, weight, bias, patch_size):
    # Pure-JAX reference: conv2d (stride = kernel = p) + flatten + transpose.
    y = jax.lax.conv_general_dilated(
        x, weight,
        window_strides=(patch_size, patch_size),
        padding="VALID",
        dimension_numbers=("NCHW", "OIHW", "NCHW"),
    )
    y = y + bias.reshape(1, -1, 1, 1)
    B, D, Hp, Wp = y.shape
    return y.reshape(B, D, Hp * Wp).transpose(0, 2, 1)


if __name__ == "__main__":
    # Small shapes consistent with the module.
    B, C, H, W = 2, 4, 16, 16
    patch_size = 8
    d_model = 32

    key = jax.random.PRNGKey(0)
    kx, kw, kb = jax.random.split(key, 3)

    x = jax.random.normal(kx, (B, C, H, W), dtype=jnp.float32)
    fan_in = C * patch_size * patch_size
    bound = 1.0 / (fan_in ** 0.5)
    weight = jax.random.uniform(kw, (d_model, C, patch_size, patch_size),
                                dtype=jnp.float32, minval=-bound, maxval=bound)
    bias = jax.random.uniform(kb, (d_model,), dtype=jnp.float32,
                              minval=-bound, maxval=bound)

    out = img_linear_backbone(x, weight, bias, patch_size=patch_size)
    out = jax.block_until_ready(out)

    ref = jax.block_until_ready(_reference(x, weight, bias, patch_size))
    assert out.shape == (B, (H // patch_size) * (W // patch_size), d_model), out.shape
    # f32 data with f32 accumulation; tolerance covers the MXU's internal bf16-pass
    # matmul decomposition (both in the kernel and in the XLA reference conv).
    err = float(jnp.max(jnp.abs(out - ref)))
    assert jnp.allclose(out, ref, atol=2e-2, rtol=2e-2), err

    print("KERNEL_OK")
</pallas_src>

<mosaic_0001>
module attributes {stable_mosaic.version = 11 : i64} {
  func.func @kernel(%arg0: i32, %arg1: i32, %arg2: memref<1x4x16x16xf32, #tpu.memory_space<vmem>>, %arg3: memref<8x32x32xf32, #tpu.memory_space<vmem>>, %arg4: memref<1x32xf32, #tpu.memory_space<vmem>>, %arg5: memref<1x2x2x32xf32, #tpu.memory_space<vmem>>, %arg6: memref<16x32xf32, #tpu.memory_space<vmem>>) attributes {dimension_semantics = [#tpu.dimension_semantics<parallel>, #tpu.dimension_semantics<parallel>], iteration_bounds = array<i64: 2, 1>, scalar_prefetch = 0 : i64, scratch_operands = 1 : i64, tpu.core_type = #tpu.core_type<tc>, window_params = [{transform_indices = @transform_0, window_bounds = array<i64: 1, 4, 16, 16>}, {pipeline_mode = #tpu.pipeline_mode<synchronous>, transform_indices = @transform_1, window_bounds = array<i64: 8, 32, 32>}, {pipeline_mode = #tpu.pipeline_mode<synchronous>, transform_indices = @transform_2, window_bounds = array<i64: 1, 32>}, {transform_indices = @transform_3, window_bounds = array<i64: 1, 2, 2, 32>}]} {
    %c0 = arith.constant 0 : index
    %c0_0 = arith.constant 0 : index
    %0 = vector.load %arg4[%c0, %c0_0] : memref<1x32xf32, #tpu.memory_space<vmem>>, vector<1x32xf32>
    %c0_1 = arith.constant 0 : index
    %c0_2 = arith.constant 0 : index
    %c0_3 = arith.constant 0 : index
    %c0_4 = arith.constant 0 : index
    %1 = vector.load %arg2[%c0_1, %c0_2, %c0_3, %c0_4] : memref<1x4x16x16xf32, #tpu.memory_space<vmem>>, vector<1x4x8x16xf32>
    %2 = vector.shape_cast %1 : vector<1x4x8x16xf32> to vector<4x8x16xf32>
    %3 = vector.shape_cast %2 : vector<4x8x16xf32> to vector<32x16xf32>
    %4 = tpu.transpose %3, [1, 0] : vector<32x16xf32> -> vector<16x32xf32>
    %c0_5 = arith.constant 0 : index
    %c0_6 = arith.constant 0 : index
    %5 = vector.load %arg6[%c0_5, %c0_6] : memref<16x32xf32, #tpu.memory_space<vmem>>, vector<16x32xf32>
    tpu.vector_store %arg6[%c0_5, %c0_6], %4 {strides = array<i32>} : memref<16x32xf32, #tpu.memory_space<vmem>>, vector<16x32xf32>,
    %cst = arith.constant 0.000000e+00 : f32
    %6 = vector.broadcast %cst : f32 to vector<2x32xf32>
    %c0_7 = arith.constant 0 : index
    %c0_8 = arith.constant 0 : index
    %7 = tpu.strided_load %arg6[%c0_7, %c0_8] {strides = array<i32: 8, 1>} : memref<16x32xf32, #tpu.memory_space<vmem>>, vector<2x32xf32>
    %c0_9 = arith.constant 0 : index
    %c0_10 = arith.constant 0 : index
    %c0_11 = arith.constant 0 : index
    %8 = vector.load %arg3[%c0_9, %c0_10, %c0_11] : memref<8x32x32xf32, #tpu.memory_space<vmem>>, vector<1x32x32xf32>
    %9 = vector.shape_cast %8 : vector<1x32x32xf32> to vector<32x32xf32>
    %cst_12 = arith.constant dense<0.000000e+00> : vector<2x32xf32>
    %10 = tpu.matmul %7, %9, %cst_12 {dimension_numbers = #tpu.dot_dimension_numbers<[1], [0], [0], [1], [0, 0, 1, 1], [], []>} : vector<2x32xf32>, vector<32x32xf32>, vector<2x32xf32> -> vector<2x32xf32>
    %11 = arith.addf %6, %10 : vector<2x32xf32>
    %c1 = arith.constant 1 : index
    %c0_13 = arith.constant 0 : index
    %12 = tpu.strided_load %arg6[%c1, %c0_13] {strides = array<i32: 8, 1>} : memref<16x32xf32, #tpu.memory_space<vmem>>, vector<2x32xf32>
    %c1_14 = arith.constant 1 : index
    %c0_15 = arith.constant 0 : index
    %c0_16 = arith.constant 0 : index
    %13 = vector.load %arg3[%c1_14, %c0_15, %c0_16] : memref<8x32x32xf32, #tpu.memory_space<vmem>>, vector<1x32x32xf32>
    %14 = vector.shape_cast %13 : vector<1x32x32xf32> to vector<32x32xf32>
    %cst_17 = arith.constant dense<0.000000e+00> : vector<2x32xf32>
    %15 = tpu.matmul %12, %14, %cst_17 {dimension_numbers = #tpu.dot_dimension_numbers<[1], [0], [0], [1], [0, 0, 1, 1], [], []>} : vector<2x32xf32>, vector<32x32xf32>, vector<2x32xf32> -> vector<2x32xf32>
    %16 = arith.addf %11, %15 : vector<2x32xf32>
    %c2 = arith.constant 2 : index
    %c0_18 = arith.constant 0 : index
    %17 = tpu.strided_load %arg6[%c2, %c0_18] {strides = array<i32: 8, 1>} : memref<16x32xf32, #tpu.memory_space<vmem>>, vector<2x32xf32>
    %c2_19 = arith.constant 2 : index
    %c0_20 = arith.constant 0 : index
    %c0_21 = arith.constant 0 : index
    %18 = vector.load %arg3[%c2_19, %c0_20, %c0_21] : memref<8x32x32xf32, #tpu.memory_space<vmem>>, vector<1x32x32xf32>
    %19 = vector.shape_cast %18 : vector<1x32x32xf32> to vector<32x32xf32>
    %cst_22 = arith.constant dense<0.000000e+00> : vector<2x32xf32>
    %20 = tpu.matmul %17, %19, %cst_22 {dimension_numbers = #tpu.dot_dimension_numbers<[1], [0], [0], [1], [0, 0, 1, 1], [], []>} : vector<2x32xf32>, vector<32x32xf32>, vector<2x32xf32> -> vector<2x32xf32>
    %21 = arith.addf %16, %20 : vector<2x32xf32>
    %c3 = arith.constant 3 : index
    %c0_23 = arith.constant 0 : index
    %22 = tpu.strided_load %arg6[%c3, %c0_23] {strides = array<i32: 8, 1>} : memref<16x32xf32, #tpu.memory_space<vmem>>, vector<2x32xf32>
    %c3_24 = arith.constant 3 : index
    %c0_25 = arith.constant 0 : index
    %c0_26 = arith.constant 0 : index
    %23 = vector.load %arg3[%c3_24, %c0_25, %c0_26] : memref<8x32x32xf32, #tpu.memory_space<vmem>>, vector<1x32x32xf32>
    %24 = vector.shape_cast %23 : vector<1x32x32xf32> to vector<32x32xf32>
    %cst_27 = arith.constant dense<0.000000e+00> : vector<2x32xf32>
    %25 = tpu.matmul %22, %24, %cst_27 {dimension_numbers = #tpu.dot_dimension_numbers<[1], [0], [0], [1], [0, 0, 1, 1], [], []>} : vector<2x32xf32>, vector<32x32xf32>, vector<2x32xf32> -> vector<2x32xf32>
    %26 = arith.addf %21, %25 : vector<2x32xf32>
    %c4 = arith.constant 4 : index
    %c0_28 = arith.constant 0 : index
    %27 = tpu.strided_load %arg6[%c4, %c0_28] {strides = array<i32: 8, 1>} : memref<16x32xf32, #tpu.memory_space<vmem>>, vector<2x32xf32>
    %c4_29 = arith.constant 4 : index
    %c0_30 = arith.constant 0 : index
    %c0_31 = arith.constant 0 : index
    %28 = vector.load %arg3[%c4_29, %c0_30, %c0_31] : memref<8x32x32xf32, #tpu.memory_space<vmem>>, vector<1x32x32xf32>
    %29 = vector.shape_cast %28 : vector<1x32x32xf32> to vector<32x32xf32>
    %cst_32 = arith.constant dense<0.000000e+00> : vector<2x32xf32>
    %30 = tpu.matmul %27, %29, %cst_32 {dimension_numbers = #tpu.dot_dimension_numbers<[1], [0], [0], [1], [0, 0, 1, 1], [], []>} : vector<2x32xf32>, vector<32x32xf32>, vector<2x32xf32> -> vector<2x32xf32>
    %31 = arith.addf %26, %30 : vector<2x32xf32>
    %c5 = arith.constant 5 : index
    %c0_33 = arith.constant 0 : index
    %32 = tpu.strided_load %arg6[%c5, %c0_33] {strides = array<i32: 8, 1>} : memref<16x32xf32, #tpu.memory_space<vmem>>, vector<2x32xf32>
    %c5_34 = arith.constant 5 : index
    %c0_35 = arith.constant 0 : index
    %c0_36 = arith.constant 0 : index
    %33 = vector.load %arg3[%c5_34, %c0_35, %c0_36] : memref<8x32x32xf32, #tpu.memory_space<vmem>>, vector<1x32x32xf32>
    %34 = vector.shape_cast %33 : vector<1x32x32xf32> to vector<32x32xf32>
    %cst_37 = arith.constant dense<0.000000e+00> : vector<2x32xf32>
    %35 = tpu.matmul %32, %34, %cst_37 {dimension_numbers = #tpu.dot_dimension_numbers<[1], [0], [0], [1], [0, 0, 1, 1], [], []>} : vector<2x32xf32>, vector<32x32xf32>, vector<2x32xf32> -> vector<2x32xf32>
    %36 = arith.addf %31, %35 : vector<2x32xf32>
    %c6 = arith.constant 6 : index
    %c0_38 = arith.constant 0 : index
    %37 = tpu.strided_load %arg6[%c6, %c0_38] {strides = array<i32: 8, 1>} : memref<16x32xf32, #tpu.memory_space<vmem>>, vector<2x32xf32>
    %c6_39 = arith.constant 6 : index
    %c0_40 = arith.constant 0 : index
    %c0_41 = arith.constant 0 : index
    %38 = vector.load %arg3[%c6_39, %c0_40, %c0_41] : memref<8x32x32xf32, #tpu.memory_space<vmem>>, vector<1x32x32xf32>
    %39 = vector.shape_cast %38 : vector<1x32x32xf32> to vector<32x32xf32>
    %cst_42 = arith.constant dense<0.000000e+00> : vector<2x32xf32>
    %40 = tpu.matmul %37, %39, %cst_42 {dimension_numbers = #tpu.dot_dimension_numbers<[1], [0], [0], [1], [0, 0, 1, 1], [], []>} : vector<2x32xf32>, vector<32x32xf32>, vector<2x32xf32> -> vector<2x32xf32>
    %41 = arith.addf %36, %40 : vector<2x32xf32>
    %c7 = arith.constant 7 : index
    %c0_43 = arith.constant 0 : index
    %42 = tpu.strided_load %arg6[%c7, %c0_43] {strides = array<i32: 8, 1>} : memref<16x32xf32, #tpu.memory_space<vmem>>, vector<2x32xf32>
    %c7_44 = arith.constant 7 : index
    %c0_45 = arith.constant 0 : index
    %c0_46 = arith.constant 0 : index
    %43 = vector.load %arg3[%c7_44, %c0_45, %c0_46] : memref<8x32x32xf32, #tpu.memory_space<vmem>>, vector<1x32x32xf32>
    %44 = vector.shape_cast %43 : vector<1x32x32xf32> to vector<32x32xf32>
    %cst_47 = arith.constant dense<0.000000e+00> : vector<2x32xf32>
    %45 = tpu.matmul %42, %44, %cst_47 {dimension_numbers = #tpu.dot_dimension_numbers<[1], [0], [0], [1], [0, 0, 1, 1], [], []>} : vector<2x32xf32>, vector<32x32xf32>, vector<2x32xf32> -> vector<2x32xf32>
    %46 = arith.addf %41, %45 : vector<2x32xf32>
    %47 = vector.broadcast %0 : vector<1x32xf32> to vector<2x32xf32>
    %48 = arith.addf %46, %47 : vector<2x32xf32>
    %c0_48 = arith.constant 0 : index
    %c0_49 = arith.constant 0 : index
    %c0_50 = arith.constant 0 : index
    %c0_51 = arith.constant 0 : index
    %49 = vector.load %arg5[%c0_48, %c0_49, %c0_50, %c0_51] : memref<1x2x2x32xf32, #tpu.memory_space<vmem>>, vector<1x1x2x32xf32>
    %50 = vector.shape_cast %49 : vector<1x1x2x32xf32> to vector<2x32xf32>
    %51 = vector.shape_cast %48 : vector<2x32xf32> to vector<1x1x2x32xf32>
    tpu.vector_store %arg5[%c0_48, %c0_49, %c0_50, %c0_51], %51 {strides = array<i32>} : memref<1x2x2x32xf32, #tpu.memory_space<vmem>>, vector<1x1x2x32xf32>,
    %c0_52 = arith.constant 0 : index
    %c0_53 = arith.constant 0 : index
    %c8 = arith.constant 8 : index
    %c0_54 = arith.constant 0 : index
    %52 = vector.load %arg2[%c0_52, %c0_53, %c8, %c0_54] : memref<1x4x16x16xf32, #tpu.memory_space<vmem>>, vector<1x4x8x16xf32>
    %53 = vector.shape_cast %52 : vector<1x4x8x16xf32> to vector<4x8x16xf32>
    %54 = vector.shape_cast %53 : vector<4x8x16xf32> to vector<32x16xf32>
    %55 = tpu.transpose %54, [1, 0] : vector<32x16xf32> -> vector<16x32xf32>
    %c0_55 = arith.constant 0 : index
    %c0_56 = arith.constant 0 : index
    %56 = vector.load %arg6[%c0_55, %c0_56] : memref<16x32xf32, #tpu.memory_space<vmem>>, vector<16x32xf32>
    tpu.vector_store %arg6[%c0_55, %c0_56], %55 {strides = array<i32>} : memref<16x32xf32, #tpu.memory_space<vmem>>, vector<16x32xf32>,
    %cst_57 = arith.constant 0.000000e+00 : f32
    %57 = vector.broadcast %cst_57 : f32 to vector<2x32xf32>
    %c0_58 = arith.constant 0 : index
    %c0_59 = arith.constant 0 : index
    %58 = tpu.strided_load %arg6[%c0_58, %c0_59] {strides = array<i32: 8, 1>} : memref<16x32xf32, #tpu.memory_space<vmem>>, vector<2x32xf32>
    %c0_60 = arith.constant 0 : index
    %c0_61 = arith.constant 0 : index
    %c0_62 = arith.constant 0 : index
    %59 = vector.load %arg3[%c0_60, %c0_61, %c0_62] : memref<8x32x32xf32, #tpu.memory_space<vmem>>, vector<1x32x32xf32>
    %60 = vector.shape_cast %59 : vector<1x32x32xf32> to vector<32x32xf32>
    %cst_63 = arith.constant dense<0.000000e+00> : vector<2x32xf32>
    %61 = tpu.matmul %58, %60, %cst_63 {dimension_numbers = #tpu.dot_dimension_numbers<[1], [0], [0], [1], [0, 0, 1, 1], [], []>} : vector<2x32xf32>, vector<32x32xf32>, vector<2x32xf32> -> vector<2x32xf32>
    %62 = arith.addf %57, %61 : vector<2x32xf32>
    %c1_64 = arith.constant 1 : index
    %c0_65 = arith.constant 0 : index
    %63 = tpu.strided_load %arg6[%c1_64, %c0_65] {strides = array<i32: 8, 1>} : memref<16x32xf32, #tpu.memory_space<vmem>>, vector<2x32xf32>
    %c1_66 = arith.constant 1 : index
    %c0_67 = arith.constant 0 : index
    %c0_68 = arith.constant 0 : index
    %64 = vector.load %arg3[%c1_66, %c0_67, %c0_68] : memref<8x32x32xf32, #tpu.memory_space<vmem>>, vector<1x32x32xf32>
    %65 = vector.shape_cast %64 : vector<1x32x32xf32> to vector<32x32xf32>
    %cst_69 = arith.constant dense<0.000000e+00> : vector<2x32xf32>
    %66 = tpu.matmul %63, %65, %cst_69 {dimension_numbers = #tpu.dot_dimension_numbers<[1], [0], [0], [1], [0, 0, 1, 1], [], []>} : vector<2x32xf32>, vector<32x32xf32>, vector<2x32xf32> -> vector<2x32xf32>
    %67 = arith.addf %62, %66 : vector<2x32xf32>
    %c2_70 = arith.constant 2 : index
    %c0_71 = arith.constant 0 : index
    %68 = tpu.strided_load %arg6[%c2_70, %c0_71] {strides = array<i32: 8, 1>} : memref<16x32xf32, #tpu.memory_space<vmem>>, vector<2x32xf32>
    %c2_72 = arith.constant 2 : index
    %c0_73 = arith.constant 0 : index
    %c0_74 = arith.constant 0 : index
    %69 = vector.load %arg3[%c2_72, %c0_73, %c0_74] : memref<8x32x32xf32, #tpu.memory_space<vmem>>, vector<1x32x32xf32>
    %70 = vector.shape_cast %69 : vector<1x32x32xf32> to vector<32x32xf32>
    %cst_75 = arith.constant dense<0.000000e+00> : vector<2x32xf32>
    %71 = tpu.matmul %68, %70, %cst_75 {dimension_numbers = #tpu.dot_dimension_numbers<[1], [0], [0], [1], [0, 0, 1, 1], [], []>} : vector<2x32xf32>, vector<32x32xf32>, vector<2x32xf32> -> vector<2x32xf32>
    %72 = arith.addf %67, %71 : vector<2x32xf32>
    %c3_76 = arith.constant 3 : index
    %c0_77 = arith.constant 0 : index
    %73 = tpu.strided_load %arg6[%c3_76, %c0_77] {strides = array<i32: 8, 1>} : memref<16x32xf32, #tpu.memory_space<vmem>>, vector<2x32xf32>
    %c3_78 = arith.constant 3 : index
    %c0_79 = arith.constant 0 : index
    %c0_80 = arith.constant 0 : index
    %74 = vector.load %arg3[%c3_78, %c0_79, %c0_80] : memref<8x32x32xf32, #tpu.memory_space<vmem>>, vector<1x32x32xf32>
    %75 = vector.shape_cast %74 : vector<1x32x32xf32> to vector<32x32xf32>
    %cst_81 = arith.constant dense<0.000000e+00> : vector<2x32xf32>
    %76 = tpu.matmul %73, %75, %cst_81 {dimension_numbers = #tpu.dot_dimension_numbers<[1], [0], [0], [1], [0, 0, 1, 1], [], []>} : vector<2x32xf32>, vector<32x32xf32>, vector<2x32xf32> -> vector<2x32xf32>
    %77 = arith.addf %72, %76 : vector<2x32xf32>
    %c4_82 = arith.constant 4 : index
    %c0_83 = arith.constant 0 : index
    %78 = tpu.strided_load %arg6[%c4_82, %c0_83] {strides = array<i32: 8, 1>} : memref<16x32xf32, #tpu.memory_space<vmem>>, vector<2x32xf32>
    %c4_84 = arith.constant 4 : index
    %c0_85 = arith.constant 0 : index
    %c0_86 = arith.constant 0 : index
    %79 = vector.load %arg3[%c4_84, %c0_85, %c0_86] : memref<8x32x32xf32, #tpu.memory_space<vmem>>, vector<1x32x32xf32>
    %80 = vector.shape_cast %79 : vector<1x32x32xf32> to vector<32x32xf32>
    %cst_87 = arith.constant dense<0.000000e+00> : vector<2x32xf32>
    %81 = tpu.matmul %78, %80, %cst_87 {dimension_numbers = #tpu.dot_dimension_numbers<[1], [0], [0], [1], [0, 0, 1, 1], [], []>} : vector<2x32xf32>, vector<32x32xf32>, vector<2x32xf32> -> vector<2x32xf32>
    %82 = arith.addf %77, %81 : vector<2x32xf32>
    %c5_88 = arith.constant 5 : index
    %c0_89 = arith.constant 0 : index
    %83 = tpu.strided_load %arg6[%c5_88, %c0_89] {strides = array<i32: 8, 1>} : memref<16x32xf32, #tpu.memory_space<vmem>>, vector<2x32xf32>
    %c5_90 = arith.constant 5 : index
    %c0_91 = arith.constant 0 : index
    %c0_92 = arith.constant 0 : index
    %84 = vector.load %arg3[%c5_90, %c0_91, %c0_92] : memref<8x32x32xf32, #tpu.memory_space<vmem>>, vector<1x32x32xf32>
    %85 = vector.shape_cast %84 : vector<1x32x32xf32> to vector<32x32xf32>
    %cst_93 = arith.constant dense<0.000000e+00> : vector<2x32xf32>
    %86 = tpu.matmul %83, %85, %cst_93 {dimension_numbers = #tpu.dot_dimension_numbers<[1], [0], [0], [1], [0, 0, 1, 1], [], []>} : vector<2x32xf32>, vector<32x32xf32>, vector<2x32xf32> -> vector<2x32xf32>
    %87 = arith.addf %82, %86 : vector<2x32xf32>
    %c6_94 = arith.constant 6 : index
    %c0_95 = arith.constant 0 : index
    %88 = tpu.strided_load %arg6[%c6_94, %c0_95] {strides = array<i32: 8, 1>} : memref<16x32xf32, #tpu.memory_space<vmem>>, vector<2x32xf32>
    %c6_96 = arith.constant 6 : index
    %c0_97 = arith.constant 0 : index
    %c0_98 = arith.constant 0 : index
    %89 = vector.load %arg3[%c6_96, %c0_97, %c0_98] : memref<8x32x32xf32, #tpu.memory_space<vmem>>, vector<1x32x32xf32>
    %90 = vector.shape_cast %89 : vector<1x32x32xf32> to vector<32x32xf32>
    %cst_99 = arith.constant dense<0.000000e+00> : vector<2x32xf32>
    %91 = tpu.matmul %88, %90, %cst_99 {dimension_numbers = #tpu.dot_dimension_numbers<[1], [0], [0], [1], [0, 0, 1, 1], [], []>} : vector<2x32xf32>, vector<32x32xf32>, vector<2x32xf32> -> vector<2x32xf32>
    %92 = arith.addf %87, %91 : vector<2x32xf32>
    %c7_100 = arith.constant 7 : index
    %c0_101 = arith.constant 0 : index
    %93 = tpu.strided_load %arg6[%c7_100, %c0_101] {strides = array<i32: 8, 1>} : memref<16x32xf32, #tpu.memory_space<vmem>>, vector<2x32xf32>
    %c7_102 = arith.constant 7 : index
    %c0_103 = arith.constant 0 : index
    %c0_104 = arith.constant 0 : index
    %94 = vector.load %arg3[%c7_102, %c0_103, %c0_104] : memref<8x32x32xf32, #tpu.memory_space<vmem>>, vector<1x32x32xf32>
    %95 = vector.shape_cast %94 : vector<1x32x32xf32> to vector<32x32xf32>
    %cst_105 = arith.constant dense<0.000000e+00> : vector<2x32xf32>
    %96 = tpu.matmul %93, %95, %cst_105 {dimension_numbers = #tpu.dot_dimension_numbers<[1], [0], [0], [1], [0, 0, 1, 1], [], []>} : vector<2x32xf32>, vector<32x32xf32>, vector<2x32xf32> -> vector<2x32xf32>
    %97 = arith.addf %92, %96 : vector<2x32xf32>
    %98 = vector.broadcast %0 : vector<1x32xf32> to vector<2x32xf32>
    %99 = arith.addf %97, %98 : vector<2x32xf32>
    %c0_106 = arith.constant 0 : index
    %c1_107 = arith.constant 1 : index
    %c0_108 = arith.constant 0 : index
    %c0_109 = arith.constant 0 : index
    %100 = vector.load %arg5[%c0_106, %c1_107, %c0_108, %c0_109] : memref<1x2x2x32xf32, #tpu.memory_space<vmem>>, vector<1x1x2x32xf32>
    %101 = vector.shape_cast %100 : vector<1x1x2x32xf32> to vector<2x32xf32>
    %102 = vector.shape_cast %99 : vector<2x32xf32> to vector<1x1x2x32xf32>
    tpu.vector_store %arg5[%c0_106, %c1_107, %c0_108, %c0_109], %102 {strides = array<i32>} : memref<1x2x2x32xf32, #tpu.memory_space<vmem>>, vector<1x1x2x32xf32>,
    return
  }
  func.func @transform_0(%arg0: i32, %arg1: i32) -> (i32, i32, i32, i32) {
    %c0_i32 = arith.constant 0 : i32
    %c0_i32_0 = arith.constant 0 : i32
    %c0_i32_1 = arith.constant 0 : i32
    return %arg0, %c0_i32, %arg1, %c0_i32_0 : i32, i32, i32, i32
  }
  func.func @transform_1(%arg0: i32, %arg1: i32) -> (i32, i32, i32) {
    %c0_i32 = arith.constant 0 : i32
    %c0_i32_0 = arith.constant 0 : i32
    %c0_i32_1 = arith.constant 0 : i32
    %c0_i32_2 = arith.constant 0 : i32
    return %c0_i32, %c0_i32_0, %c0_i32_1 : i32, i32, i32
  }
  func.func @transform_2(%arg0: i32, %arg1: i32) -> (i32, i32) {
    %c0_i32 = arith.constant 0 : i32
    %c0_i32_0 = arith.constant 0 : i32
    %c0_i32_1 = arith.constant 0 : i32
    return %c0_i32, %c0_i32_0 : i32, i32
  }
  func.func @transform_3(%arg0: i32, %arg1: i32) -> (i32, i32, i32, i32) {
    %c0_i32 = arith.constant 0 : i32
    %c0_i32_0 = arith.constant 0 : i32
    %c0_i32_1 = arith.constant 0 : i32
    return %arg0, %arg1, %c0_i32, %c0_i32_0 : i32, i32, i32, i32
  }
}

</mosaic_0001>

<llo_original>
// kernel: img_linear_backbone.1
$region0: #{img_linear_backbone.1}
  #allocation0 [shape = 'u32[]', space=smem, size = 0x4, offset = 0x4, fixed_abs, tag = 'smem constant byte address 0x4 - core index']
  #allocation1 [shape = 'u32[72,128]{1,0:T(1,128)}', space=vmem, size = 0x9000, scoped, tag = 'internal scratch']
  #allocation2 [shape = 'f32[16,32]{1,0:T(8,128)}', space=vmem, size = 0x2000, scoped, tag = 'scratch operand']
  %s0 = inlined_call_operand.vmem [shape: f32[2,4,16,16], index: 0, kind: input, shape index: {}]
  %s1 = inlined_call_operand.vmem [shape: f32[8,32,32], index: 1, kind: input, shape index: {}]
  %s2 = inlined_call_operand.vmem [shape: f32[1,32], index: 2, kind: input, shape index: {}]
  %s3 = inlined_call_operand.hbm [shape: f32[2,2,2,32], index: 3, kind: output, shape index: {}]
  %s4 = sld [smem:[#allocation0]]
  $region45: #{img_linear_backbone.1} parent=0
    _
  %s6 = ssub.s32 1, %s4
  %s7 = scalar_select 0, %s6, %s4
  $region1: #{img_linear_backbone.1} parent=0
    #allocation3 [shape = 'u8[4096]{0}', space=vmem, size = 0x1000, scoped, tag = 'output window, operand 0']
    #allocation4 [shape = 's32[2]{0}', space=sflag, size = 0x8, scoped, tag = 'scoped memory for img_linear_backbone.1']
    %8 = vsyncpa [#allocation4], 0
    %s9 = scalar_lea.sflag [#allocation4], 1
    %10 = vsyncpa %s9, 0
    loop: start=0, step=1, limit=4
    $region2: #{img_linear_backbone.1} parent=1 // loop_pre_header
      _
    $region3: #{img_linear_backbone.1} parent=1 // loop_header
      %s12 = sphi 0, %s16
      %p13 = scmp.ge.s32.totalorder %s12, 4
      %s19 = sphi 0, %s31
      %s20 = sphi 0, %s27
      %s21 = sphi 0, %s19
      %s22 = sphi 0, %s20
      %s23 = sphi 0, %s21
      %s24 = sphi 0, %s22
      %s36 = sphi 0, %s38
      %s39 = sphi 0, %s36
      %s40 = sphi 0, %s39
      %s56 = sphi 0, %s40
      %s60 = sphi 0, %s60
      %s62 = sphi 0, %s60
      %s63 = sphi 0, %s62
      %s77 = sphi 0, %s63
      %s81 = sphi 0, %s81
      %s83 = sphi 0, %s81
      %s84 = sphi 0, %s83
      %s98 = sphi 0, %s84
      %s106 = sphi 0, %s108
      %s109 = sphi 0, %s106
      %s110 = sphi 0, %s109
      %s126 = sphi 0, %s110
    $region4: #{img_linear_backbone.1} parent=1 // loop_header_branch
      %15 = sbr.rel (%p13) target = $region8
    $region5: #{img_linear_backbone.1} parent=1 // loop_body
      %s17 = ssub.s32 %s12, 1
      %s18 = ssub.s32 %s12, 2
      %s25 = sadd.s32 1, %s20
      %p26 = scmp.ge.s32.totalorder %s25, 1
      %s27 = scalar_select %p26, 0, %s25
      %s28 = sadd.s32 1, %s19
      %s29 = scalar_select %p26, %s28, %s19
      %p30 = scmp.ge.s32.totalorder %s29, 2
      %s31 = scalar_select %p30, 0, %s29
      %s32 = ssub.s32 %s19, %s31
      %s33 = ssub.s32 %s20, %s27
      %s34 = sor.u32 %s32, %s33
      %p35 = scmp.eq.s32.totalorder %s34, 0
      %s37 = sadd.s32 %s36, 1
      %s38 = scalar_select %p35, %s36, %s37
      %p41 = pneg %p35
      %p42 = scmp.eq.s32.totalorder %s12, 1
      %p43 = por %p41, %p42
      %p44 = scmp.ne.s32.totalorder %s36, %s39
      %p45 = scmp.eq.s32.totalorder %s12, 0
      %p46 = por %p44, %p45
      %p47 = scmp.ne.s32.totalorder %s36, %s39
      %p48 = scmp.eq.s32.totalorder %s17, 1
      %p49 = por %p47, %p48
      %p50 = scmp.ne.s32.totalorder %s39, %s40
      %p51 = scmp.eq.s32.totalorder %s17, 0
      %p52 = por %p50, %p51
      %p53 = scmp.ne.s32.totalorder %s39, %s40
      %p54 = scmp.eq.s32.totalorder %s18, 1
      %p55 = por %p53, %p54
      %p57 = scmp.ne.s32.totalorder %s40, %s56
      %p58 = scmp.eq.s32.totalorder %s18, 0
      %p59 = por %p57, %p58
      %s61 = sadd.s32 %s60, 1
      %p64 = scmp.eq.s32.totalorder %s12, 1
      %p65 = scmp.ne.s32.totalorder %s60, %s62
      %p66 = scmp.eq.s32.totalorder %s12, 0
      %p67 = por %p65, %p66
      %p68 = scmp.ne.s32.totalorder %s60, %s62
      %p69 = scmp.eq.s32.totalorder %s17, 1
      %p70 = por %p68, %p69
      %p71 = scmp.ne.s32.totalorder %s62, %s63
      %p72 = scmp.eq.s32.totalorder %s17, 0
      %p73 = por %p71, %p72
      %p74 = scmp.ne.s32.totalorder %s62, %s63
      %p75 = scmp.eq.s32.totalorder %s18, 1
      %p76 = por %p74, %p75
      %p78 = scmp.ne.s32.totalorder %s63, %s77
      %p79 = scmp.eq.s32.totalorder %s18, 0
      %p80 = por %p78, %p79
      %s82 = sadd.s32 %s81, 1
      %p85 = scmp.eq.s32.totalorder %s12, 1
      %p86 = scmp.ne.s32.totalorder %s81, %s83
      %p87 = scmp.eq.s32.totalorder %s12, 0
      %p88 = por %p86, %p87
      %p89 = scmp.ne.s32.totalorder %s81, %s83
      %p90 = scmp.eq.s32.totalorder %s17, 1
      %p91 = por %p89, %p90
      %p92 = scmp.ne.s32.totalorder %s83, %s84
      %p93 = scmp.eq.s32.totalorder %s17, 0
      %p94 = por %p92, %p93
      %p95 = scmp.ne.s32.totalorder %s83, %s84
      %p96 = scmp.eq.s32.totalorder %s18, 1
      %p97 = por %p95, %p96
      %p99 = scmp.ne.s32.totalorder %s84, %s98
      %p100 = scmp.eq.s32.totalorder %s18, 0
      %p101 = por %p99, %p100
      %s102 = ssub.s32 %s19, %s31
      %s103 = ssub.s32 %s20, %s27
      %s104 = sor.u32 %s102, %s103
      %p105 = scmp.eq.s32.totalorder %s104, 0
      %s107 = sadd.s32 %s106, 1
      %s108 = scalar_select %p105, %s106, %s107
      %p111 = pneg %p105
      %p112 = scmp.eq.s32.totalorder %s12, 1
      %p113 = por %p111, %p112
      %p114 = scmp.ne.s32.totalorder %s106, %s109
      %p115 = scmp.eq.s32.totalorder %s12, 0
      %p116 = por %p114, %p115
      %p117 = scmp.ne.s32.totalorder %s106, %s109
      %p118 = scmp.eq.s32.totalorder %s17, 1
      %p119 = por %p117, %p118
      %p120 = scmp.ne.s32.totalorder %s109, %s110
      %p121 = scmp.eq.s32.totalorder %s17, 0
      %p122 = por %p120, %p121
      %p123 = scmp.ne.s32.totalorder %s109, %s110
      %p124 = scmp.eq.s32.totalorder %s18, 1
      %p125 = por %p123, %p124
      %p127 = scmp.ne.s32.totalorder %s110, %s126
      %p128 = scmp.eq.s32.totalorder %s18, 0
      %p129 = por %p127, %p128
      %p130 = scmp.le.s32.totalorder 1, %s12
      %p131 = scmp.lt.s32.totalorder %s12, 3
      %p132 = pnand %p130, %p131
      %p133 = pneg %p132
      // Predicated region
      $region9: #{img_linear_backbone.1} parent=5 // pred_check
        _
      $region10: #{img_linear_backbone.1} parent=5 // pred_check_branch
        %135 = sbr.rel (%p132) target = $region12
      $region11: #{img_linear_backbone.1} parent=5 // pred_region
        %s136 = ssub.s32 %s12, 1
        // Predicated region
        $region13: #{img_linear_backbone.1} parent=11 // pred_check
          %p137 = pneg %p73
        $region14: #{img_linear_backbone.1} parent=11 // pred_check_branch
          %139 = sbr.rel (%p137) target = $region16
        $region15: #{img_linear_backbone.1} parent=11 // pred_region
          _
        $region16: #{img_linear_backbone.1} parent=11 // pred_fallthru
          _
        // Predicated region
        $region17: #{img_linear_backbone.1} parent=11 // pred_check
          %p140 = pneg %p94
        $region18: #{img_linear_backbone.1} parent=11 // pred_check_branch
          %142 = sbr.rel (%p140) target = $region20
        $region19: #{img_linear_backbone.1} parent=11 // pred_region
          _
        $region20: #{img_linear_backbone.1} parent=11 // pred_fallthru
          _
      $region12: #{img_linear_backbone.1} parent=5 // pred_fallthru
        _
      %p143 = scmp.lt.s32.totalorder %s12, 2
      // Predicated region
      $region21: #{img_linear_backbone.1} parent=5 // pred_check
        %p144 = pneg %p143
      $region22: #{img_linear_backbone.1} parent=5 // pred_check_branch
        %146 = sbr.rel (%p144) target = $region24
      $region23: #{img_linear_backbone.1} parent=5 // pred_region
        // Predicated region
        $region25: #{img_linear_backbone.1} parent=23 // pred_check
          %p147 = pneg %p46
        $region26: #{img_linear_backbone.1} parent=23 // pred_check_branch
          %149 = sbr.rel (%p147) target = $region28
        $region27: #{img_linear_backbone.1} parent=23 // pred_region
          %s150 = smul.u32 2, %s20
          %p151 = scmp.lt.s32.totalorder %s19, 1
          %s152 = scalar_select %p151, %s19, 1
          %p153 = scmp.lt.s32.totalorder %s150, 1
          %s154 = scalar_select %p153, %s150, 1
          %s155 = smul.addr %s152, 8
          %s156 = sadd.s32 %s154, %s155
          %s157 = smul.addr %s156, 8
          %s158 = scalar_lea.vmem %s0, %s157
          %s159 = smul.u32 2, %s20
        $region28: #{img_linear_backbone.1} parent=23 // pred_fallthru
          _
      $region24: #{img_linear_backbone.1} parent=5 // pred_fallthru
        _
      %p160 = scmp.le.s32.totalorder 1, %s12
      %p161 = scmp.lt.s32.totalorder %s12, 3
      %p162 = pnand %p160, %p161
      %p163 = pneg %p162
      // Predicated region
      $region29: #{img_linear_backbone.1} parent=5 // pred_check
        _
      $region30: #{img_linear_backbone.1} parent=5 // pred_check_branch
        %165 = sbr.rel (%p162) target = $region32
      $region31: #{img_linear_backbone.1} parent=5 // pred_region
        %s166 = ssub.s32 %s12, 1
        %s167 = smul.u32 2, %s22
        %p168 = scmp.lt.s32.totalorder %s21, 1
        %s169 = scalar_select %p168, %s21, 1
        %p170 = scmp.lt.s32.totalorder %s167, 1
        %s171 = scalar_select %p170, %s167, 1
        %s172 = smul.addr %s169, 8
        %s173 = sadd.s32 %s171, %s172
        %s174 = smul.addr %s173, 8
        %s175 = scalar_lea.vmem %s0, %s174
        %p176 = pneg %p52
        %p177 = pneg %p49
        %p178 = pneg %p73
        %p179 = pneg %p70
        %p180 = pneg %p94
        %p181 = pneg %p91
        %p182 = pneg %p122
        %p183 = pneg %p119
        %s184 = sand.u32 %s109, 1
        %s185 = scalar_lea.sflag [#allocation4], %s184
        %s186 = sand.u32 %s109, 1
        %s187 = smul.addr %s186, 4
        %s188 = scalar_lea.vmem [#allocation3], %s187
        %s189 = smul.u32 2, %s22
        %p190 = scmp.lt.s32.totalorder %s21, 1
        %s191 = scalar_select %p190, %s21, 1
        %p192 = scmp.lt.s32.totalorder %s189, 1
        %s193 = scalar_select %p192, %s189, 1
        %s194 = smul.addr %s191, 8
        %s195 = sadd.s32 %s193, %s194
        %s196 = smul.addr %s195, 8
        %s197 = scalar_lea.vmem %s0, %s196
        %s198 = smul.u32 2, %s22
        %s199 = smul.u32 2, %s22
        %v200 = vld [vmem:[%s2] sm:$0x1]
        %v201 = vld [vmem:[%s197] sm:$0xff]
        %v202 = vld [vmem:[%s197 + $0x10] sm:$0xff]
        %v203 = vld [vmem:[%s197 + $0x20] sm:$0xff]
        %v204 = vld [vmem:[%s197 + $0x30] sm:$0xff]
        %205 = vxpose.xlu0.b32.start [1/16] %v201, 128
        %206 = vxpose.xlu0.b32.cont [2/16] %v202, 128
        %207 = vxpose.xlu0.b32.cont [3/16] %v203, 128
        %208 = vxpose.xlu0.b32.cont [4/16] %v204, 128
        %209 = vxpose.xlu0.b32.cont [5/16] 0.0, 128
        %210 = vxpose.xlu0.b32.cont [6/16] 0.0, 128
        %211 = vxpose.xlu0.b32.cont [7/16] 0.0, 128
        %212 = vxpose.xlu0.b32.cont [8/16] 0.0, 128
        %213 = vxpose.xlu0.b32.cont [9/16] 0.0, 128
        %214 = vxpose.xlu0.b32.cont [10/16] 0.0, 128
        %215 = vxpose.xlu0.b32.cont [11/16] 0.0, 128
        %216 = vxpose.xlu0.b32.cont [12/16] 0.0, 128
        %217 = vxpose.xlu0.b32.cont [13/16] 0.0, 128
        %218 = vxpose.xlu0.b32.cont [14/16] 0.0, 128
        %219 = vxpose.xlu0.b32.cont [15/16] 0.0, 128
        %220 = vxpose.xlu0.b32.end [16/16] 0.0, 128
        %v221 = vpop.trf.xlu0
        %v222 = vpop.trf.xlu0
        %v223 = vpop.trf.xlu0
        %v224 = vpop.trf.xlu0
        %v225 = vpop.trf.xlu0
        %v226 = vpop.trf.xlu0
        %v227 = vpop.trf.xlu0
        %v228 = vpop.trf.xlu0
        %v229 = vpop.trf.xlu0
        %v230 = vpop.trf.xlu0
        %v231 = vpop.trf.xlu0
        %v232 = vpop.trf.xlu0
        %v233 = vpop.trf.xlu0
        %v234 = vpop.trf.xlu0
        %v235 = vpop.trf.xlu0
        %v236 = vpop.trf.xlu0
        %vm237 = vcmask 261120
        %238 = vst.msk [vmem:[#allocation2] sm:$0xff] %vm237, %v221
        %239 = vst.msk [vmem:[#allocation2 + $0x8] sm:$0xff] %vm237, %v222
        %v240 = vld [vmem:[#allocation2] ss:$8 sm:$0x3]
        %v241 = vld [vmem:[%s1] sm:$0xff]
        %v242 = vld [vmem:[%s1 + $0x8] sm:$0xff]
        %v243 = vld [vmem:[%s1 + $0x10] sm:$0xff]
        %v244 = vld [vmem:[%s1 + $0x18] sm:$0xff]
        %s245 = scalar_lea.vmem [#allocation2], 1
        %v246 = vld [vmem:[%s245] ss:$8 sm:$0x3]
        %s247 = scalar_lea.vmem %s1, 32
        %v248 = vld [vmem:[%s247] sm:$0xff]
        %v249 = vld [vmem:[%s247 + $0x8] sm:$0xff]
        %v250 = vld [vmem:[%s247 + $0x10] sm:$0xff]
        %v251 = vld [vmem:[%s247 + $0x18] sm:$0xff]
        %v253 = vsel %vm237, %v246, 0
        %255 = vmatpush.msra.mxu0 0.0
        %256 = vmatpush.msra.mxu0 0.0
        %257 = vmatpush.msra.mxu0 0.0
        %258 = vmatpush.msra.mxu0 0.0
        %259 = vmatpush.msra.mxu0 0.0
        %260 = vmatpush.msra.mxu0 0.0
        %261 = vmatpush.msra.mxu0 0.0
        %262 = vmatpush.msra.mxu0 0.0
        %263 = vmatpush.msra.mxu0 0.0
        %264 = vmatpush.msra.mxu0 0.0
        %265 = vmatpush.msra.mxu0 0.0
        %266 = vmatpush.msra.mxu0 0.0
        %267 = vmatpush.msra.mxu0 %v251
        %268 = vmatpush.msra.mxu0 %v250
        %269 = vmatpush.msra.mxu0 %v249
        %270 = vmatpush.msra.mxu0 %v248
        %271 = vmatmul.f32.gmra.mxu0 %v253
        %v272 = vpop.f32.mrf.mxu0
        %v273 = vadd.f32 0.0, %v272
        %274 = vdwg.mxu0
        %v276 = vsel %vm237, %v240, 0
        %278 = vmatpush.msra.mxu0 0.0
        %279 = vmatpush.msra.mxu0 0.0
        %280 = vmatpush.msra.mxu0 0.0
        %281 = vmatpush.msra.mxu0 0.0
        %282 = vmatpush.msra.mxu0 0.0
        %283 = vmatpush.msra.mxu0 0.0
        %284 = vmatpush.msra.mxu0 0.0
        %285 = vmatpush.msra.mxu0 0.0
        %286 = vmatpush.msra.mxu0 0.0
        %287 = vmatpush.msra.mxu0 0.0
        %288 = vmatpush.msra.mxu0 0.0
        %289 = vmatpush.msra.mxu0 0.0
        %290 = vmatpush.msra.mxu0 %v244
        %291 = vmatpush.msra.mxu0 %v243
        %292 = vmatpush.msra.mxu0 %v242
        %293 = vmatpush.msra.mxu0 %v241
        %294 = vmatmul.f32.gmra.mxu0 %v276
        %v295 = vpop.f32.mrf.mxu0
        %v296 = vadd.f32 %v273, %v295
        %297 = vdwg.mxu0
        %s298 = scalar_lea.vmem [#allocation2], 2
        %v299 = vld [vmem:[%s298] ss:$8 sm:$0x3]
        %s300 = scalar_lea.vmem %s1, 64
        %v301 = vld [vmem:[%s300] sm:$0xff]
        %v302 = vld [vmem:[%s300 + $0x8] sm:$0xff]
        %v303 = vld [vmem:[%s300 + $0x10] sm:$0xff]
        %v304 = vld [vmem:[%s300 + $0x18] sm:$0xff]
        %v306 = vsel %vm237, %v299, 0
        %308 = vmatpush.msra.mxu0 0.0
        %309 = vmatpush.msra.mxu0 0.0
        %310 = vmatpush.msra.mxu0 0.0
        %311 = vmatpush.msra.mxu0 0.0
        %312 = vmatpush.msra.mxu0 0.0
        %313 = vmatpush.msra.mxu0 0.0
        %314 = vmatpush.msra.mxu0 0.0
        %315 = vmatpush.msra.mxu0 0.0
        %316 = vmatpush.msra.mxu0 0.0
        %317 = vmatpush.msra.mxu0 0.0
        %318 = vmatpush.msra.mxu0 0.0
        %319 = vmatpush.msra.mxu0 0.0
        %320 = vmatpush.msra.mxu0 %v304
        %321 = vmatpush.msra.mxu0 %v303
        %322 = vmatpush.msra.mxu0 %v302
        %323 = vmatpush.msra.mxu0 %v301
        %324 = vmatmul.f32.gmra.mxu0 %v306
        %v325 = vpop.f32.mrf.mxu0
        %v326 = vadd.f32 0.0, %v325
        %327 = vdwg.mxu0
        %v328 = vadd.f32 %v296, %v326
        %s329 = scalar_lea.vmem [#allocation2], 3
        %v330 = vld [vmem:[%s329] ss:$8 sm:$0x3]
        %s331 = scalar_lea.vmem %s1, 96
        %v332 = vld [vmem:[%s331] sm:$0xff]
        %v333 = vld [vmem:[%s331 + $0x8] sm:$0xff]
        %v334 = vld [vmem:[%s331 + $0x10] sm:$0xff]
        %v335 = vld [vmem:[%s331 + $0x18] sm:$0xff]
        %v337 = vsel %vm237, %v330, 0
        %339 = vmatpush.msra.mxu0 0.0
        %340 = vmatpush.msra.mxu0 0.0
        %341 = vmatpush.msra.mxu0 0.0
        %342 = vmatpush.msra.mxu0 0.0
        %343 = vmatpush.msra.mxu0 0.0
        %344 = vmatpush.msra.mxu0 0.0
        %345 = vmatpush.msra.mxu0 0.0
        %346 = vmatpush.msra.mxu0 0.0
        %347 = vmatpush.msra.mxu0 0.0
        %348 = vmatpush.msra.mxu0 0.0
        %349 = vmatpush.msra.mxu0 0.0
        %350 = vmatpush.msra.mxu0 0.0
        %351 = vmatpush.msra.mxu0 %v335
        %352 = vmatpush.msra.mxu0 %v334
        %353 = vmatpush.msra.mxu0 %v333
        %354 = vmatpush.msra.mxu0 %v332
        %355 = vmatmul.f32.gmra.mxu0 %v337
        %v356 = vpop.f32.mrf.mxu0
        %v357 = vadd.f32 0.0, %v356
        %358 = vdwg.mxu0
        %v359 = vadd.f32 %v328, %v357
        %s360 = scalar_lea.vmem [#allocation2], 4
        %v361 = vld [vmem:[%s360] ss:$8 sm:$0x3]
        %s362 = scalar_lea.vmem %s1, 128
        %v363 = vld [vmem:[%s362] sm:$0xff]
        %v364 = vld [vmem:[%s362 + $0x8] sm:$0xff]
        %v365 = vld [vmem:[%s362 + $0x10] sm:$0xff]
        %v366 = vld [vmem:[%s362 + $0x18] sm:$0xff]
        %v368 = vsel %vm237, %v361, 0
        %370 = vmatpush.msra.mxu0 0.0
        %371 = vmatpush.msra.mxu0 0.0
        %372 = vmatpush.msra.mxu0 0.0
        %373 = vmatpush.msra.mxu0 0.0
        %374 = vmatpush.msra.mxu0 0.0
        %375 = vmatpush.msra.mxu0 0.0
        %376 = vmatpush.msra.mxu0 0.0
        %377 = vmatpush.msra.mxu0 0.0
        %378 = vmatpush.msra.mxu0 0.0
        %379 = vmatpush.msra.mxu0 0.0
        %380 = vmatpush.msra.mxu0 0.0
        %381 = vmatpush.msra.mxu0 0.0
        %382 = vmatpush.msra.mxu0 %v366
        %383 = vmatpush.msra.mxu0 %v365
        %384 = vmatpush.msra.mxu0 %v364
        %385 = vmatpush.msra.mxu0 %v363
        %386 = vmatmul.f32.gmra.mxu0 %v368
        %v387 = vpop.f32.mrf.mxu0
        %v388 = vadd.f32 0.0, %v387
        %389 = vdwg.mxu0
        %v390 = vadd.f32 %v359, %v388
        %s391 = scalar_lea.vmem [#allocation2], 5
        %v392 = vld [vmem:[%s391] ss:$8 sm:$0x3]
        %s393 = scalar_lea.vmem %s1, 160
        %v394 = vld [vmem:[%s393] sm:$0xff]
        %v395 = vld [vmem:[%s393 + $0x8] sm:$0xff]
        %v396 = vld [vmem:[%s393 + $0x10] sm:$0xff]
        %v397 = vld [vmem:[%s393 + $0x18] sm:$0xff]
        %v399 = vsel %vm237, %v392, 0
        %401 = vmatpush.msra.mxu0 0.0
        %402 = vmatpush.msra.mxu0 0.0
        %403 = vmatpush.msra.mxu0 0.0
        %404 = vmatpush.msra.mxu0 0.0
        %405 = vmatpush.msra.mxu0 0.0
        %406 = vmatpush.msra.mxu0 0.0
        %407 = vmatpush.msra.mxu0 0.0
        %408 = vmatpush.msra.mxu0 0.0
        %409 = vmatpush.msra.mxu0 0.0
        %410 = vmatpush.msra.mxu0 0.0
        %411 = vmatpush.msra.mxu0 0.0
        %412 = vmatpush.msra.mxu0 0.0
        %413 = vmatpush.msra.mxu0 %v397
        %414 = vmatpush.msra.mxu0 %v396
        %415 = vmatpush.msra.mxu0 %v395
        %416 = vmatpush.msra.mxu0 %v394
        %417 = vmatmul.f32.gmra.mxu0 %v399
        %v418 = vpop.f32.mrf.mxu0
        %v419 = vadd.f32 0.0, %v418
        %420 = vdwg.mxu0
        %v421 = vadd.f32 %v390, %v419
        %s422 = scalar_lea.vmem [#allocation2], 6
        %v423 = vld [vmem:[%s422] ss:$8 sm:$0x3]
        %s424 = scalar_lea.vmem %s1, 192
        %v425 = vld [vmem:[%s424] sm:$0xff]
        %v426 = vld [vmem:[%s424 + $0x8] sm:$0xff]
        %v427 = vld [vmem:[%s424 + $0x10] sm:$0xff]
        %v428 = vld [vmem:[%s424 + $0x18] sm:$0xff]
        %v430 = vsel %vm237, %v423, 0
        %432 = vmatpush.msra.mxu0 0.0
        %433 = vmatpush.msra.mxu0 0.0
        %434 = vmatpush.msra.mxu0 0.0
        %435 = vmatpush.msra.mxu0 0.0
        %436 = vmatpush.msra.mxu0 0.0
        %437 = vmatpush.msra.mxu0 0.0
        %438 = vmatpush.msra.mxu0 0.0
        %439 = vmatpush.msra.mxu0 0.0
        %440 = vmatpush.msra.mxu0 0.0
        %441 = vmatpush.msra.mxu0 0.0
        %442 = vmatpush.msra.mxu0 0.0
        %443 = vmatpush.msra.mxu0 0.0
        %444 = vmatpush.msra.mxu0 %v428
        %445 = vmatpush.msra.mxu0 %v427
        %446 = vmatpush.msra.mxu0 %v426
        %447 = vmatpush.msra.mxu0 %v425
        %448 = vmatmul.f32.gmra.mxu0 %v430
        %v449 = vpop.f32.mrf.mxu0
        %v450 = vadd.f32 0.0, %v449
        %451 = vdwg.mxu0
        %v452 = vadd.f32 %v421, %v450
        %s453 = scalar_lea.vmem [#allocation2], 7
        %v454 = vld [vmem:[%s453] ss:$8 sm:$0x3]
        %s455 = scalar_lea.vmem %s1, 224
        %v456 = vld [vmem:[%s455] sm:$0xff]
        %v457 = vld [vmem:[%s455 + $0x8] sm:$0xff]
        %v458 = vld [vmem:[%s455 + $0x10] sm:$0xff]
        %v459 = vld [vmem:[%s455 + $0x18] sm:$0xff]
        %v461 = vsel %vm237, %v454, 0
        %463 = vmatpush.msra.mxu0 0.0
        %464 = vmatpush.msra.mxu0 0.0
        %465 = vmatpush.msra.mxu0 0.0
        %466 = vmatpush.msra.mxu0 0.0
        %467 = vmatpush.msra.mxu0 0.0
        %468 = vmatpush.msra.mxu0 0.0
        %469 = vmatpush.msra.mxu0 0.0
        %470 = vmatpush.msra.mxu0 0.0
        %471 = vmatpush.msra.mxu0 0.0
        %472 = vmatpush.msra.mxu0 0.0
        %473 = vmatpush.msra.mxu0 0.0
        %474 = vmatpush.msra.mxu0 0.0
        %475 = vmatpush.msra.mxu0 %v459
        %476 = vmatpush.msra.mxu0 %v458
        %477 = vmatpush.msra.mxu0 %v457
        %478 = vmatpush.msra.mxu0 %v456
        %479 = vmatmul.f32.gmra.mxu0 %v461
        %v480 = vpop.f32.mrf.mxu0
        %v481 = vadd.f32 0.0, %v480
        %482 = vdwg.mxu0
        %v483 = vadd.f32 %v452, %v481
        %v485 = vperm.slane %v200, 0
        %v487 = vadd.f32 %v483, %v485
        %vm488 = vcmask 254976
        %489 = vst.msk [vmem:[%s188] sm:$0x3] %vm488, %v487
        %v490 = vld [vmem:[%s197 + $0x8] sm:$0xff]
        %v491 = vld [vmem:[%s197 + $0x18] sm:$0xff]
        %v492 = vld [vmem:[%s197 + $0x28] sm:$0xff]
        %v493 = vld [vmem:[%s197 + $0x38] sm:$0xff]
        %494 = vxpose.xlu0.b32.start [1/16] %v490, 128
        %495 = vxpose.xlu0.b32.cont [2/16] %v491, 128
        %496 = vxpose.xlu0.b32.cont [3/16] %v492, 128
        %497 = vxpose.xlu0.b32.cont [4/16] %v493, 128
        %498 = vxpose.xlu0.b32.cont [5/16] 0.0, 128
        %499 = vxpose.xlu0.b32.cont [6/16] 0.0, 128
        %500 = vxpose.xlu0.b32.cont [7/16] 0.0, 128
        %501 = vxpose.xlu0.b32.cont [8/16] 0.0, 128
        %502 = vxpose.xlu0.b32.cont [9/16] 0.0, 128
        %503 = vxpose.xlu0.b32.cont [10/16] 0.0, 128
        %504 = vxpose.xlu0.b32.cont [11/16] 0.0, 128
        %505 = vxpose.xlu0.b32.cont [12/16] 0.0, 128
        %506 = vxpose.xlu0.b32.cont [13/16] 0.0, 128
        %507 = vxpose.xlu0.b32.cont [14/16] 0.0, 128
        %508 = vxpose.xlu0.b32.cont [15/16] 0.0, 128
        %509 = vxpose.xlu0.b32.end [16/16] 0.0, 128
        %v510 = vpop.trf.xlu0
        %v511 = vpop.trf.xlu0
        %v512 = vpop.trf.xlu0
        %v513 = vpop.trf.xlu0
        %v514 = vpop.trf.xlu0
        %v515 = vpop.trf.xlu0
        %v516 = vpop.trf.xlu0
        %v517 = vpop.trf.xlu0
        %v518 = vpop.trf.xlu0
        %v519 = vpop.trf.xlu0
        %v520 = vpop.trf.xlu0
        %v521 = vpop.trf.xlu0
        %v522 = vpop.trf.xlu0
        %v523 = vpop.trf.xlu0
        %v524 = vpop.trf.xlu0
        %v525 = vpop.trf.xlu0
        %526 = vst.msk [vmem:[#allocation2] sm:$0xff] %vm237, %v510
        %527 = vst.msk [vmem:[#allocation2 + $0x8] sm:$0xff] %vm237, %v511
        %v528 = vld [vmem:[#allocation2] ss:$8 sm:$0x3]
        %v529 = vld [vmem:[%s1] sm:$0xff]
        %v530 = vld [vmem:[%s1 + $0x8] sm:$0xff]
        %v531 = vld [vmem:[%s1 + $0x10] sm:$0xff]
        %v532 = vld [vmem:[%s1 + $0x18] sm:$0xff]
        %v533 = vld [vmem:[%s245] ss:$8 sm:$0x3]
        %v534 = vld [vmem:[%s247] sm:$0xff]
        %v535 = vld [vmem:[%s247 + $0x8] sm:$0xff]
        %v536 = vld [vmem:[%s247 + $0x10] sm:$0xff]
        %v537 = vld [vmem:[%s247 + $0x18] sm:$0xff]
        %v539 = vsel %vm237, %v533, 0
        %541 = vmatpush.msra.mxu0 0.0
        %542 = vmatpush.msra.mxu0 0.0
        %543 = vmatpush.msra.mxu0 0.0
        %544 = vmatpush.msra.mxu0 0.0
        %545 = vmatpush.msra.mxu0 0.0
        %546 = vmatpush.msra.mxu0 0.0
        %547 = vmatpush.msra.mxu0 0.0
        %548 = vmatpush.msra.mxu0 0.0
        %549 = vmatpush.msra.mxu0 0.0
        %550 = vmatpush.msra.mxu0 0.0
        %551 = vmatpush.msra.mxu0 0.0
        %552 = vmatpush.msra.mxu0 0.0
        %553 = vmatpush.msra.mxu0 %v537
        %554 = vmatpush.msra.mxu0 %v536
        %555 = vmatpush.msra.mxu0 %v535
        %556 = vmatpush.msra.mxu0 %v534
        %557 = vmatmul.f32.gmra.mxu0 %v539
        %v558 = vpop.f32.mrf.mxu0
        %v559 = vadd.f32 0.0, %v558
        %560 = vdwg.mxu0
        %v562 = vsel %vm237, %v528, 0
        %564 = vmatpush.msra.mxu0 0.0
        %565 = vmatpush.msra.mxu0 0.0
        %566 = vmatpush.msra.mxu0 0.0
        %567 = vmatpush.msra.mxu0 0.0
        %568 = vmatpush.msra.mxu0 0.0
        %569 = vmatpush.msra.mxu0 0.0
        %570 = vmatpush.msra.mxu0 0.0
        %571 = vmatpush.msra.mxu0 0.0
        %572 = vmatpush.msra.mxu0 0.0
        %573 = vmatpush.msra.mxu0 0.0
        %574 = vmatpush.msra.mxu0 0.0
        %575 = vmatpush.msra.mxu0 0.0
        %576 = vmatpush.msra.mxu0 %v532
        %577 = vmatpush.msra.mxu0 %v531
        %578 = vmatpush.msra.mxu0 %v530
        %579 = vmatpush.msra.mxu0 %v529
        %580 = vmatmul.f32.gmra.mxu0 %v562
        %v581 = vpop.f32.mrf.mxu0
        %v582 = vadd.f32 %v559, %v581
        %583 = vdwg.mxu0
        %v584 = vld [vmem:[%s298] ss:$8 sm:$0x3]
        %v585 = vld [vmem:[%s300] sm:$0xff]
        %v586 = vld [vmem:[%s300 + $0x8] sm:$0xff]
        %v587 = vld [vmem:[%s300 + $0x10] sm:$0xff]
        %v588 = vld [vmem:[%s300 + $0x18] sm:$0xff]
        %v590 = vsel %vm237, %v584, 0
        %592 = vmatpush.msra.mxu0 0.0
        %593 = vmatpush.msra.mxu0 0.0
        %594 = vmatpush.msra.mxu0 0.0
        %595 = vmatpush.msra.mxu0 0.0
        %596 = vmatpush.msra.mxu0 0.0
        %597 = vmatpush.msra.mxu0 0.0
        %598 = vmatpush.msra.mxu0 0.0
        %599 = vmatpush.msra.mxu0 0.0
        %600 = vmatpush.msra.mxu0 0.0
        %601 = vmatpush.msra.mxu0 0.0
        %602 = vmatpush.msra.mxu0 0.0
        %603 = vmatpush.msra.mxu0 0.0
        %604 = vmatpush.msra.mxu0 %v588
        %605 = vmatpush.msra.mxu0 %v587
        %606 = vmatpush.msra.mxu0 %v586
        %607 = vmatpush.msra.mxu0 %v585
        %608 = vmatmul.f32.gmra.mxu0 %v590
        %v609 = vpop.f32.mrf.mxu0
        %v610 = vadd.f32 0.0, %v609
        %611 = vdwg.mxu0
        %v612 = vadd.f32 %v582, %v610
        %v613 = vld [vmem:[%s329] ss:$8 sm:$0x3]
        %v614 = vld [vmem:[%s331] sm:$0xff]
        %v615 = vld [vmem:[%s331 + $0x8] sm:$0xff]
        %v616 = vld [vmem:[%s331 + $0x10] sm:$0xff]
        %v617 = vld [vmem:[%s331 + $0x18] sm:$0xff]
        %v619 = vsel %vm237, %v613, 0
        %621 = vmatpush.msra.mxu0 0.0
        %622 = vmatpush.msra.mxu0 0.0
        %623 = vmatpush.msra.mxu0 0.0
        %624 = vmatpush.msra.mxu0 0.0
        %625 = vmatpush.msra.mxu0 0.0
        %626 = vmatpush.msra.mxu0 0.0
        %627 = vmatpush.msra.mxu0 0.0
        %628 = vmatpush.msra.mxu0 0.0
        %629 = vmatpush.msra.mxu0 0.0
        %630 = vmatpush.msra.mxu0 0.0
        %631 = vmatpush.msra.mxu0 0.0
        %632 = vmatpush.msra.mxu0 0.0
        %633 = vmatpush.msra.mxu0 %v617
        %634 = vmatpush.msra.mxu0 %v616
        %635 = vmatpush.msra.mxu0 %v615
        %636 = vmatpush.msra.mxu0 %v614
        %637 = vmatmul.f32.gmra.mxu0 %v619
        %v638 = vpop.f32.mrf.mxu0
        %v639 = vadd.f32 0.0, %v638
        %640 = vdwg.mxu0
        %v641 = vadd.f32 %v612, %v639
        %v642 = vld [vmem:[%s360] ss:$8 sm:$0x3]
        %v643 = vld [vmem:[%s362] sm:$0xff]
        %v644 = vld [vmem:[%s362 + $0x8] sm:$0xff]
        %v645 = vld [vmem:[%s362 + $0x10] sm:$0xff]
        %v646 = vld [vmem:[%s362 + $0x18] sm:$0xff]
        %v648 = vsel %vm237, %v642, 0
        %650 = vmatpush.msra.mxu0 0.0
        %651 = vmatpush.msra.mxu0 0.0
        %652 = vmatpush.msra.mxu0 0.0
        %653 = vmatpush.msra.mxu0 0.0
        %654 = vmatpush.msra.mxu0 0.0
        %655 = vmatpush.msra.mxu0 0.0
        %656 = vmatpush.msra.mxu0 0.0
        %657 = vmatpush.msra.mxu0 0.0
        %658 = vmatpush.msra.mxu0 0.0
        %659 = vmatpush.msra.mxu0 0.0
        %660 = vmatpush.msra.mxu0 0.0
        %661 = vmatpush.msra.mxu0 0.0
        %662 = vmatpush.msra.mxu0 %v646
        %663 = vmatpush.msra.mxu0 %v645
        %664 = vmatpush.msra.mxu0 %v644
        %665 = vmatpush.msra.mxu0 %v643
        %666 = vmatmul.f32.gmra.mxu0 %v648
        %v667 = vpop.f32.mrf.mxu0
        %v668 = vadd.f32 0.0, %v667
        %669 = vdwg.mxu0
        %v670 = vadd.f32 %v641, %v668
        %v671 = vld [vmem:[%s391] ss:$8 sm:$0x3]
        %v672 = vld [vmem:[%s393] sm:$0xff]
        %v673 = vld [vmem:[%s393 + $0x8] sm:$0xff]
        %v674 = vld [vmem:[%s393 + $0x10] sm:$0xff]
        %v675 = vld [vmem:[%s393 + $0x18] sm:$0xff]
        %v677 = vsel %vm237, %v671, 0
        %679 = vmatpush.msra.mxu0 0.0
        %680 = vmatpush.msra.mxu0 0.0
        %681 = vmatpush.msra.mxu0 0.0
        %682 = vmatpush.msra.mxu0 0.0
        %683 = vmatpush.msra.mxu0 0.0
        %684 = vmatpush.msra.mxu0 0.0
        %685 = vmatpush.msra.mxu0 0.0
        %686 = vmatpush.msra.mxu0 0.0
        %687 = vmatpush.msra.mxu0 0.0
        %688 = vmatpush.msra.mxu0 0.0
        %689 = vmatpush.msra.mxu0 0.0
        %690 = vmatpush.msra.mxu0 0.0
        %691 = vmatpush.msra.mxu0 %v675
        %692 = vmatpush.msra.mxu0 %v674
        %693 = vmatpush.msra.mxu0 %v673
        %694 = vmatpush.msra.mxu0 %v672
        %695 = vmatmul.f32.gmra.mxu0 %v677
        %v696 = vpop.f32.mrf.mxu0
        %v697 = vadd.f32 0.0, %v696
        %698 = vdwg.mxu0
        %v699 = vadd.f32 %v670, %v697
        %v700 = vld [vmem:[%s422] ss:$8 sm:$0x3]
        %v701 = vld [vmem:[%s424] sm:$0xff]
        %v702 = vld [vmem:[%s424 + $0x8] sm:$0xff]
        %v703 = vld [vmem:[%s424 + $0x10] sm:$0xff]
        %v704 = vld [vmem:[%s424 + $0x18] sm:$0xff]
        %v706 = vsel %vm237, %v700, 0
        %708 = vmatpush.msra.mxu0 0.0
        %709 = vmatpush.msra.mxu0 0.0
        %710 = vmatpush.msra.mxu0 0.0
        %711 = vmatpush.msra.mxu0 0.0
        %712 = vmatpush.msra.mxu0 0.0
        %713 = vmatpush.msra.mxu0 0.0
        %714 = vmatpush.msra.mxu0 0.0
        %715 = vmatpush.msra.mxu0 0.0
        %716 = vmatpush.msra.mxu0 0.0
        %717 = vmatpush.msra.mxu0 0.0
        %718 = vmatpush.msra.mxu0 0.0
        %719 = vmatpush.msra.mxu0 0.0
        %720 = vmatpush.msra.mxu0 %v704
        %721 = vmatpush.msra.mxu0 %v703
        %722 = vmatpush.msra.mxu0 %v702
        %723 = vmatpush.msra.mxu0 %v701
        %724 = vmatmul.f32.gmra.mxu0 %v706
        %v725 = vpop.f32.mrf.mxu0
        %v726 = vadd.f32 0.0, %v725
        %727 = vdwg.mxu0
        %v728 = vadd.f32 %v699, %v726
        %v729 = vld [vmem:[%s453] ss:$8 sm:$0x3]
        %v730 = vld [vmem:[%s455] sm:$0xff]
        %v731 = vld [vmem:[%s455 + $0x8] sm:$0xff]
        %v732 = vld [vmem:[%s455 + $0x10] sm:$0xff]
        %v733 = vld [vmem:[%s455 + $0x18] sm:$0xff]
        %v735 = vsel %vm237, %v729, 0
        %737 = vmatpush.msra.mxu0 0.0
        %738 = vmatpush.msra.mxu0 0.0
        %739 = vmatpush.msra.mxu0 0.0
        %740 = vmatpush.msra.mxu0 0.0
        %741 = vmatpush.msra.mxu0 0.0
        %742 = vmatpush.msra.mxu0 0.0
        %743 = vmatpush.msra.mxu0 0.0
        %744 = vmatpush.msra.mxu0 0.0
        %745 = vmatpush.msra.mxu0 0.0
        %746 = vmatpush.msra.mxu0 0.0
        %747 = vmatpush.msra.mxu0 0.0
        %748 = vmatpush.msra.mxu0 0.0
        %749 = vmatpush.msra.mxu0 %v733
        %750 = vmatpush.msra.mxu0 %v732
        %751 = vmatpush.msra.mxu0 %v731
        %752 = vmatpush.msra.mxu0 %v730
        %753 = vmatmul.f32.gmra.mxu0 %v735
        %v754 = vpop.f32.mrf.mxu0
        %v755 = vadd.f32 0.0, %v754
        %756 = vdwg.mxu0
        %v757 = vadd.f32 %v728, %v755
        %v758 = vadd.f32 %v757, %v485
        %s759 = scalar_lea.vmem %s188, 2 [#allocation3]
        %760 = vst.msk [vmem:[%s759] sm:$0x3] %vm488, %v758
        %s761 = sand.u32 %s109, 1
        %s762 = scalar_lea.sflag [#allocation4], %s761
        %s763 = sand.u32 %s109, 1
        %s764 = smul.addr %s763, 4
        %s765 = scalar_lea.vmem [#allocation3], %s764
        // Predicated region
        $region33: #{img_linear_backbone.1} parent=31 // pred_check
          %p766 = pneg %p119
        $region34: #{img_linear_backbone.1} parent=31 // pred_check_branch
          %768 = sbr.rel (%p766) target = $region36
        $region35: #{img_linear_backbone.1} parent=31 // pred_region
          %s769 = smul.u32 2, %s22
          %771 = vsyncadd %s762, 0
          %s772 = smul.addr %s21, 2
          %s773 = sadd.s32 %s769, %s772
          %s774 = smul.addr %s773, 2
          %s775 = scalar_lea.hbm %s3, %s774
          %s776 = sshll.u32 %s765, 4
          %s777 = int_to_ptr.vmem [resolvable:$true] %s776
          %s778 = sshll.u32 %s775, 4
          %s779 = int_to_ptr.hbm [resolvable:$true] %s778
          %784 = dma.vmem_to_hbm [thread:$0]  %s777, 64, %s779, %s762, 32, 32, 2
        $region36: #{img_linear_backbone.1} parent=31 // pred_fallthru
          _
      $region32: #{img_linear_backbone.1} parent=5 // pred_fallthru
        _
      %p785 = scmp.le.s32.totalorder 2, %s12
      // Predicated region
      $region37: #{img_linear_backbone.1} parent=5 // pred_check
        %p786 = pneg %p785
      $region38: #{img_linear_backbone.1} parent=5 // pred_check_branch
        %788 = sbr.rel (%p786) target = $region40
      $region39: #{img_linear_backbone.1} parent=5 // pred_region
        %s789 = ssub.s32 %s12, 2
        // Predicated region
        $region41: #{img_linear_backbone.1} parent=39 // pred_check
          %p790 = pneg %p125
        $region42: #{img_linear_backbone.1} parent=39 // pred_check_branch
          %792 = sbr.rel (%p790) target = $region44
        $region43: #{img_linear_backbone.1} parent=39 // pred_region
          %s793 = sand.u32 %s110, 1
          %s794 = scalar_lea.sflag [#allocation4], %s793
          %s795 = sand.u32 %s110, 1
          %s796 = smul.addr %s795, 4
          %s797 = scalar_lea.vmem [#allocation3], %s796
          %799 = dma.done %s794, 64
        $region44: #{img_linear_backbone.1} parent=39 // pred_fallthru
          _
      $region40: #{img_linear_backbone.1} parent=5 // pred_fallthru
        _
    $region6: #{img_linear_backbone.1} parent=1 // loop_footer
      %s16 = sadd.s32 1, %s12
    $region7: #{img_linear_backbone.1} parent=1 // loop_footer_branch
      %11 = sbr.rel target = $region3
    $region8: #{img_linear_backbone.1} parent=1 // loop_exit
      _
    %800 = vsyncpa [#allocation4], 1
    %s801 = scalar_lea.sflag [#allocation4], 1
    %802 = vsyncpa %s801, 1

</llo_original>
